<compile_context>
chip_gen: v5e
topology: v5e:2x2
jax: 0.10.0
libtpu: 0.0.40
codegen_flags: <defaults>
</compile_context>

<pallas_src>
import math
import numpy as np
import jax
import jax.numpy as jnp
from jax import lax
from jax.experimental import pallas as pl
from jax.experimental.pallas import tpu as pltpu


def _round_up(v, m):
    return (v + m - 1) // m * m


def _gelu_exact(v):
    # PyTorch F.gelu default = exact erf formulation
    return 0.5 * v * (1.0 + lax.erf(v * 0.7071067811865476))


def make_cls_kernel(d_orig, d_pad, matmul_dtype):
    """Build the per-tile kernel. Scaling factors are pre-folded into W/b."""
    inv_d = 1.0 / float(d_orig)
    need_mask = d_pad != d_orig

    def kernel(
        x_ref,
        wf1_ref, bf1_ref, wf2_ref, bf2_ref,
        ws1_ref, bs1_ref, ln_g_ref, ln_b_ref, ws2_ref, bs2_ref,
        wg_fast_ref, wg_slow_ref, bg_ref,
        balance_ref,
        out_ref, fast_out_ref,
    ):
        x = x_ref[...].astype(jnp.float32)

        def mm(a, w_ref):
            return jnp.dot(a.astype(matmul_dtype), w_ref[...],
                           preferred_element_type=jnp.float32)

        # --- fast pathway: Linear(D->2D)+GELU -> Dropout(identity) -> Linear(2D->D)+GELU
        h = _gelu_exact(mm(x, wf1_ref) + bf1_ref[...])
        fast = _gelu_exact(mm(h, wf2_ref) + bf2_ref[...])

        # --- slow pathway: Linear(D->D)+GELU -> LayerNorm(D) -> Linear(D->D)+GELU
        s = _gelu_exact(mm(x, ws1_ref) + bs1_ref[...])
        # Padded lanes of s are exactly 0 (zero-padded weights/biases, gelu(0)=0), so the
        # sum over all lanes equals the sum over the original D lanes.
        mu = jnp.sum(s, axis=-1, keepdims=True) * inv_d
        centered = s - mu
        if need_mask:
            lane = lax.broadcasted_iota(jnp.int32, s.shape, 1)
            centered = jnp.where(lane < d_orig, centered, 0.0)
        var = jnp.sum(centered * centered, axis=-1, keepdims=True) * inv_d
        s_ln = centered * lax.rsqrt(var + 1e-5) * ln_g_ref[...] + ln_b_ref[...]
        slow = _gelu_exact(mm(s_ln, ws2_ref) + bs2_ref[...])

        # --- integration gate (concat split into two matmuls)
        gate = jax.nn.sigmoid(
            mm(fast, wg_fast_ref) + mm(slow, wg_slow_ref) + bg_ref[...]
        )

        balance = balance_ref[0, 0]
        mixed = fast + balance * (slow - fast)           # == (1-b)*fast + b*slow
        out = x + gate * (mixed - x)                     # == gate*mixed + (1-gate)*x

        out_ref[...] = out.astype(out_ref.dtype)
        fast_out_ref[...] = fast.astype(fast_out_ref.dtype)

    return kernel


def init_params(key, D):
    """Deterministic synthetic init mirroring nn.Linear default (U[-1/sqrt(in), 1/sqrt(in)]).
    Weights stored as (in_dim, out_dim); biases/scales as (1, out_dim)."""
    def linear(key, din, dout):
        kw, kb = jax.random.split(key)
        bound = 1.0 / math.sqrt(din)
        w = jax.random.uniform(kw, (din, dout), jnp.float32, -bound, bound)
        b = jax.random.uniform(kb, (1, dout), jnp.float32, -bound, bound)
        return w, b

    keys = jax.random.split(key, 5)
    wf1, bf1 = linear(keys[0], D, 2 * D)
    wf2, bf2 = linear(keys[1], 2 * D, D)
    ws1, bs1 = linear(keys[2], D, D)
    ws2, bs2 = linear(keys[3], D, D)
    wg, bg = linear(keys[4], 2 * D, D)      # integration gate, weight.T is (2D, D)

    return {
        'wf1': wf1, 'bf1': bf1, 'sf1': jnp.ones((1, 2 * D), jnp.float32),
        'wf2': wf2, 'bf2': bf2, 'sf2': jnp.ones((1, D), jnp.float32),
        'ws1': ws1, 'bs1': bs1, 'ss1': jnp.ones((1, D), jnp.float32),
        'ln_g': jnp.ones((1, D), jnp.float32), 'ln_b': jnp.zeros((1, D), jnp.float32),
        'ws2': ws2, 'bs2': bs2, 'ss2': jnp.ones((1, D), jnp.float32),
        'wg_fast': wg[:D], 'wg_slow': wg[D:], 'bg': bg,
    }


def prepare_params(params, D, weight_dtype=jnp.float32):
    """Fold homeostatic scales into W/b, zero-pad to lane-dense shapes, cast weights."""
    d_pad = _round_up(D, 128)
    h_pad = _round_up(2 * D, 128)

    def fold(w, b, s):
        # (x @ W + b) * s == x @ (W*s) + (b*s) exactly (s broadcasts over out_dim).
        return w * s, b * s

    wf1, bf1 = fold(params['wf1'], params['bf1'], params['sf1'])
    wf2, bf2 = fold(params['wf2'], params['bf2'], params['sf2'])
    ws1, bs1 = fold(params['ws1'], params['bs1'], params['ss1'])
    ws2, bs2 = fold(params['ws2'], params['bs2'], params['ss2'])

    def pad_w(w, r, c):
        return jnp.pad(w, ((0, r - w.shape[0]), (0, c - w.shape[1]))).astype(weight_dtype)

    def pad_v(v, c):  # biases / LN params stay f32 (added to f32 accumulator)
        return jnp.pad(v, ((0, 0), (0, c - v.shape[1]))).astype(jnp.float32)

    return {
        'd_orig': D, 'd_pad': d_pad, 'h_pad': h_pad,
        'matmul_dtype': jnp.dtype(weight_dtype),
        'wf1': pad_w(wf1, d_pad, h_pad), 'bf1': pad_v(bf1, h_pad),
        'wf2': pad_w(wf2, h_pad, d_pad), 'bf2': pad_v(bf2, d_pad),
        'ws1': pad_w(ws1, d_pad, d_pad), 'bs1': pad_v(bs1, d_pad),
        'ln_g': pad_v(params['ln_g'], d_pad), 'ln_b': pad_v(params['ln_b'], d_pad),
        'ws2': pad_w(ws2, d_pad, d_pad), 'bs2': pad_v(bs2, d_pad),
        'wg_fast': pad_w(params['wg_fast'], d_pad, d_pad),
        'wg_slow': pad_w(params['wg_slow'], d_pad, d_pad),
        'bg': pad_v(params['bg'], d_pad),
    }


def cls_forward(x, prepared, sleep_state, cls_balance=0.3, *, tile_m=128):
    """x: (B, S, D) float32. Returns (output, fast_output), both (B, S, D)."""
    # Python-level branch, same as the PyTorch module (sleep_state flags are host scalars).
    if sleep_state['is_wake']:
        balance = cls_balance * 0.3
    elif sleep_state['is_nrem']:
        balance = cls_balance * 0.7
    else:
        balance = cls_balance

    B, S, D = x.shape
    assert D == prepared['d_orig']
    d_pad = prepared['d_pad']
    h_pad = prepared['h_pad']

    N = B * S
    tile_m = min(tile_m, _round_up(N, 8))
    n_pad = _round_up(N, tile_m)

    xf = x.reshape(N, D)
    xf = jnp.pad(xf, ((0, n_pad - N), (0, d_pad - D)))
    bal = jnp.array([[balance]], dtype=jnp.float32)

    weights = (
        prepared['wf1'], prepared['bf1'], prepared['wf2'], prepared['bf2'],
        prepared['ws1'], prepared['bs1'], prepared['ln_g'], prepared['ln_b'],
        prepared['ws2'], prepared['bs2'],
        prepared['wg_fast'], prepared['wg_slow'], prepared['bg'],
    )

    grid = (n_pad // tile_m,)
    act_spec = lambda: pl.BlockSpec((tile_m, d_pad), lambda i: (i, 0))
    # Weights / biases: constant index_map -> VMEM-resident across the row grid.
    const_spec = lambda arr: pl.BlockSpec(arr.shape, lambda i: (0, 0))

    in_specs = (
        [act_spec()]
        + [const_spec(w) for w in weights]
        + [pl.BlockSpec(memory_space=pltpu.MemorySpace.SMEM)]   # balance scalar
    )
    out_specs = (act_spec(), act_spec())

    # --- cost estimate (advisory) ---
    flops = int(2 * n_pad * (2 * d_pad * h_pad + 4 * d_pad * d_pad))
    transcendentals = int(n_pad * (h_pad + 4 * d_pad))
    w_bytes = int(sum(int(np.prod(w.shape)) * w.dtype.itemsize for w in weights))
    bytes_accessed = int(3 * n_pad * d_pad * 4 + w_bytes)

    # --- VMEM budget: double-buffered activation blocks + resident weights + headroom.
    block_bytes = 3 * tile_m * d_pad * 4 + tile_m * h_pad * 4 + w_bytes
    vmem_limit = int(max(32 * 1024 * 1024, 2 * block_bytes + 8 * 1024 * 1024))
    # TODO(synk): for large D on v7x (64 MiB VMEM) switch to K-tiled streaming of wf1/wf2
    # instead of keeping all weights resident.

    kernel = make_cls_kernel(D, d_pad, prepared['matmul_dtype'])

    out, fast = pl.pallas_call(
        kernel,
        grid=grid,
        out_shape=(jax.ShapeDtypeStruct((n_pad, d_pad), x.dtype),
                   jax.ShapeDtypeStruct((n_pad, d_pad), x.dtype)),
        in_specs=in_specs,
        out_specs=out_specs,
        compiler_params=pltpu.CompilerParams(
            dimension_semantics=("parallel",),
            vmem_limit_bytes=vmem_limit,
        ),
        cost_estimate=pl.CostEstimate(
            flops=flops,
            transcendentals=transcendentals,
            bytes_accessed=bytes_accessed,
        ),
    )(xf, *weights, bal)

    out = out[:N, :D].reshape(B, S, D)
    fast = fast[:N, :D].reshape(B, S, D)
    return out, fast


def cls_forward_ref(x, params, sleep_state, cls_balance=0.3):
    """Pure-JAX reference of the same forward pass (for correctness check)."""
    if sleep_state['is_wake']:
        balance = cls_balance * 0.3
    elif sleep_state['is_nrem']:
        balance = cls_balance * 0.7
    else:
        balance = cls_balance
    gelu = lambda v: jax.nn.gelu(v, approximate=False)

    h = gelu((x @ params['wf1'] + params['bf1']) * params['sf1'])
    fast = gelu((h @ params['wf2'] + params['bf2']) * params['sf2'])

    s = gelu((x @ params['ws1'] + params['bs1']) * params['ss1'])
    mu = s.mean(-1, keepdims=True)
    var = ((s - mu) ** 2).mean(-1, keepdims=True)
    s_ln = (s - mu) / jnp.sqrt(var + 1e-5) * params['ln_g'] + params['ln_b']
    slow = gelu((s_ln @ params['ws2'] + params['bs2']) * params['ss2'])

    gate = jax.nn.sigmoid(fast @ params['wg_fast'] + slow @ params['wg_slow'] + params['bg'])
    out = (1.0 - balance) * fast + balance * slow
    out = gate * out + (1.0 - gate) * x
    return out, fast


if __name__ == "__main__":
    B, S, D = 2, 8, 32
    key = jax.random.PRNGKey(0)
    kx, kp = jax.random.split(key)
    x = jax.random.normal(kx, (B, S, D), jnp.float32)
    params = init_params(kp, D)
    sleep_state = {'is_wake': True, 'is_nrem': False}

    out_ref, fast_ref = cls_forward_ref(x, params, sleep_state)

    # f32 matmuls (exact-fidelity path)
    prep_f32 = prepare_params(params, D, weight_dtype=jnp.float32)
    out, fast = cls_forward(x, prep_f32, sleep_state)
    out = jax.block_until_ready(out)
    fast = jax.block_until_ready(fast)
    assert np.allclose(np.asarray(out), np.asarray(out_ref), rtol=2e-3, atol=2e-3)
    assert np.allclose(np.asarray(fast), np.asarray(fast_ref), rtol=2e-3, atol=2e-3)

    # bf16 matmul operands with f32 accumulation (v6e/v7x MXU path), relaxed tolerance
    prep_bf16 = prepare_params(params, D, weight_dtype=jnp.bfloat16)
    out16, fast16 = cls_forward(x, prep_bf16, sleep_state)
    out16 = jax.block_until_ready(out16)
    fast16 = jax.block_until_ready(fast16)
    assert np.allclose(np.asarray(out16), np.asarray(out_ref), rtol=5e-2, atol=5e-2)
    assert np.allclose(np.asarray(fast16), np.asarray(fast_ref), rtol=5e-2, atol=5e-2)

    print("KERNEL_OK")
</pallas_src>

<mosaic_0001>
module attributes {stable_mosaic.version = 11 : i64} {
  func.func @kernel(%arg0: i32, %arg1: memref<16x128xf32, #tpu.memory_space<vmem>>, %arg2: memref<128x128xf32, #tpu.memory_space<vmem>>, %arg3: memref<1x128xf32, #tpu.memory_space<vmem>>, %arg4: memref<128x128xf32, #tpu.memory_space<vmem>>, %arg5: memref<1x128xf32, #tpu.memory_space<vmem>>, %arg6: memref<128x128xf32, #tpu.memory_space<vmem>>, %arg7: memref<1x128xf32, #tpu.memory_space<vmem>>, %arg8: memref<1x128xf32, #tpu.memory_space<vmem>>, %arg9: memref<1x128xf32, #tpu.memory_space<vmem>>, %arg10: memref<128x128xf32, #tpu.memory_space<vmem>>, %arg11: memref<1x128xf32, #tpu.memory_space<vmem>>, %arg12: memref<128x128xf32, #tpu.memory_space<vmem>>, %arg13: memref<128x128xf32, #tpu.memory_space<vmem>>, %arg14: memref<1x128xf32, #tpu.memory_space<vmem>>, %arg15: memref<1x1xf32, #tpu.memory_space<smem>>, %arg16: memref<16x128xf32, #tpu.memory_space<vmem>>, %arg17: memref<16x128xf32, #tpu.memory_space<vmem>>) attributes {dimension_semantics = [#tpu.dimension_semantics<parallel>], iteration_bounds = array<i64: 1>, scalar_prefetch = 0 : i64, scratch_operands = 0 : i64, tpu.core_type = #tpu.core_type<tc>, window_params = [{transform_indices = @transform_0, window_bounds = array<i64: 16, 128>}, {pipeline_mode = #tpu.pipeline_mode<synchronous>, transform_indices = @transform_1, window_bounds = array<i64: 128, 128>}, {pipeline_mode = #tpu.pipeline_mode<synchronous>, transform_indices = @transform_2, window_bounds = array<i64: 1, 128>}, {pipeline_mode = #tpu.pipeline_mode<synchronous>, transform_indices = @transform_3, window_bounds = array<i64: 128, 128>}, {pipeline_mode = #tpu.pipeline_mode<synchronous>, transform_indices = @transform_4, window_bounds = array<i64: 1, 128>}, {pipeline_mode = #tpu.pipeline_mode<synchronous>, transform_indices = @transform_5, window_bounds = array<i64: 128, 128>}, {pipeline_mode = #tpu.pipeline_mode<synchronous>, transform_indices = @transform_6, window_bounds = array<i64: 1, 128>}, {pipeline_mode = #tpu.pipeline_mode<synchronous>, transform_indices = @transform_7, window_bounds = array<i64: 1, 128>}, {pipeline_mode = #tpu.pipeline_mode<synchronous>, transform_indices = @transform_8, window_bounds = array<i64: 1, 128>}, {pipeline_mode = #tpu.pipeline_mode<synchronous>, transform_indices = @transform_9, window_bounds = array<i64: 128, 128>}, {pipeline_mode = #tpu.pipeline_mode<synchronous>, transform_indices = @transform_10, window_bounds = array<i64: 1, 128>}, {pipeline_mode = #tpu.pipeline_mode<synchronous>, transform_indices = @transform_11, window_bounds = array<i64: 128, 128>}, {pipeline_mode = #tpu.pipeline_mode<synchronous>, transform_indices = @transform_12, window_bounds = array<i64: 128, 128>}, {pipeline_mode = #tpu.pipeline_mode<synchronous>, transform_indices = @transform_13, window_bounds = array<i64: 1, 128>}, {transform_indices = @transform_14, window_bounds = array<i64: 1, 1>}, {transform_indices = @transform_15, window_bounds = array<i64: 16, 128>}, {transform_indices = @transform_16, window_bounds = array<i64: 16, 128>}]} {
    %c0 = arith.constant 0 : index
    %c0_0 = arith.constant 0 : index
    %0 = vector.load %arg1[%c0, %c0_0] : memref<16x128xf32, #tpu.memory_space<vmem>>, vector<16x128xf32>
    %c0_1 = arith.constant 0 : index
    %c0_2 = arith.constant 0 : index
    %1 = vector.load %arg2[%c0_1, %c0_2] : memref<128x128xf32, #tpu.memory_space<vmem>>, vector<128x128xf32>
    %cst = arith.constant dense<0.000000e+00> : vector<16x128xf32>
    %2 = tpu.matmul %0, %1, %cst {dimension_numbers = #tpu.dot_dimension_numbers<[1], [0], [0], [1], [0, 0, 1, 1], [], []>} : vector<16x128xf32>, vector<128x128xf32>, vector<16x128xf32> -> vector<16x128xf32>
    %c0_3 = arith.constant 0 : index
    %c0_4 = arith.constant 0 : index
    %3 = vector.load %arg3[%c0_3, %c0_4] : memref<1x128xf32, #tpu.memory_space<vmem>>, vector<1x128xf32>
    %4 = vector.broadcast %3 : vector<1x128xf32> to vector<16x128xf32>
    %5 = arith.addf %2, %4 : vector<16x128xf32>
    %cst_5 = arith.constant 5.000000e-01 : f32
    %6 = vector.broadcast %cst_5 : f32 to vector<16x128xf32>
    %7 = arith.mulf %6, %5 : vector<16x128xf32>
    %cst_6 = arith.constant 0.707106769 : f32
    %8 = vector.broadcast %cst_6 : f32 to vector<16x128xf32>
    %9 = arith.mulf %5, %8 : vector<16x128xf32>
    %10 = math.erf %9 : vector<16x128xf32>
    %cst_7 = arith.constant 1.000000e+00 : f32
    %11 = vector.broadcast %cst_7 : f32 to vector<16x128xf32>
    %12 = arith.addf %11, %10 : vector<16x128xf32>
    %13 = arith.mulf %7, %12 : vector<16x128xf32>
    %c0_8 = arith.constant 0 : index
    %c0_9 = arith.constant 0 : index
    %14 = vector.load %arg4[%c0_8, %c0_9] : memref<128x128xf32, #tpu.memory_space<vmem>>, vector<128x128xf32>
    %cst_10 = arith.constant dense<0.000000e+00> : vector<16x128xf32>
    %15 = tpu.matmul %13, %14, %cst_10 {dimension_numbers = #tpu.dot_dimension_numbers<[1], [0], [0], [1], [0, 0, 1, 1], [], []>} : vector<16x128xf32>, vector<128x128xf32>, vector<16x128xf32> -> vector<16x128xf32>
    %c0_11 = arith.constant 0 : index
    %c0_12 = arith.constant 0 : index
    %16 = vector.load %arg5[%c0_11, %c0_12] : memref<1x128xf32, #tpu.memory_space<vmem>>, vector<1x128xf32>
    %17 = vector.broadcast %16 : vector<1x128xf32> to vector<16x128xf32>
    %18 = arith.addf %15, %17 : vector<16x128xf32>
    %cst_13 = arith.constant 5.000000e-01 : f32
    %19 = vector.broadcast %cst_13 : f32 to vector<16x128xf32>
    %20 = arith.mulf %19, %18 : vector<16x128xf32>
    %cst_14 = arith.constant 0.707106769 : f32
    %21 = vector.broadcast %cst_14 : f32 to vector<16x128xf32>
    %22 = arith.mulf %18, %21 : vector<16x128xf32>
    %23 = math.erf %22 : vector<16x128xf32>
    %cst_15 = arith.constant 1.000000e+00 : f32
    %24 = vector.broadcast %cst_15 : f32 to vector<16x128xf32>
    %25 = arith.addf %24, %23 : vector<16x128xf32>
    %26 = arith.mulf %20, %25 : vector<16x128xf32>
    %c0_16 = arith.constant 0 : index
    %c0_17 = arith.constant 0 : index
    %27 = vector.load %arg6[%c0_16, %c0_17] : memref<128x128xf32, #tpu.memory_space<vmem>>, vector<128x128xf32>
    %cst_18 = arith.constant dense<0.000000e+00> : vector<16x128xf32>
    %28 = tpu.matmul %0, %27, %cst_18 {dimension_numbers = #tpu.dot_dimension_numbers<[1], [0], [0], [1], [0, 0, 1, 1], [], []>} : vector<16x128xf32>, vector<128x128xf32>, vector<16x128xf32> -> vector<16x128xf32>
    %c0_19 = arith.constant 0 : index
    %c0_20 = arith.constant 0 : index
    %29 = vector.load %arg7[%c0_19, %c0_20] : memref<1x128xf32, #tpu.memory_space<vmem>>, vector<1x128xf32>
    %30 = vector.broadcast %29 : vector<1x128xf32> to vector<16x128xf32>
    %31 = arith.addf %28, %30 : vector<16x128xf32>
    %cst_21 = arith.constant 5.000000e-01 : f32
    %32 = vector.broadcast %cst_21 : f32 to vector<16x128xf32>
    %33 = arith.mulf %32, %31 : vector<16x128xf32>
    %cst_22 = arith.constant 0.707106769 : f32
    %34 = vector.broadcast %cst_22 : f32 to vector<16x128xf32>
    %35 = arith.mulf %31, %34 : vector<16x128xf32>
    %36 = math.erf %35 : vector<16x128xf32>
    %cst_23 = arith.constant 1.000000e+00 : f32
    %37 = vector.broadcast %cst_23 : f32 to vector<16x128xf32>
    %38 = arith.addf %37, %36 : vector<16x128xf32>
    %39 = arith.mulf %33, %38 : vector<16x128xf32>
    %cst_24 = arith.constant dense<0.000000e+00> : vector<16xf32>
    %40 = vector.multi_reduction <add>, %39, %cst_24 [1] : vector<16x128xf32> to vector<16xf32>
    %41 = vector.shape_cast %40 : vector<16xf32> to vector<16x1xf32>
    %cst_25 = arith.constant 3.125000e-02 : f32
    %42 = vector.broadcast %cst_25 : f32 to vector<16x1xf32>
    %43 = arith.mulf %41, %42 : vector<16x1xf32>
    %44 = vector.broadcast %43 : vector<16x1xf32> to vector<16x128xf32>
    %45 = arith.subf %39, %44 : vector<16x128xf32>
    %46 = tpu.iota {dimensions = array<i32: 1>} : vector<16x128xi32>
    %c32_i32 = arith.constant 32 : i32
    %47 = vector.broadcast %c32_i32 : i32 to vector<16x128xi32>
    %48 = arith.cmpi slt, %46, %47 : vector<16x128xi32>
    %cst_26 = arith.constant 0.000000e+00 : f32
    %49 = vector.broadcast %cst_26 : f32 to vector<16x128xf32>
    %50 = arith.select %48, %45, %49 : vector<16x128xi1>, vector<16x128xf32>
    %51 = arith.mulf %50, %50 : vector<16x128xf32>
    %cst_27 = arith.constant dense<0.000000e+00> : vector<16xf32>
    %52 = vector.multi_reduction <add>, %51, %cst_27 [1] : vector<16x128xf32> to vector<16xf32>
    %53 = vector.shape_cast %52 : vector<16xf32> to vector<16x1xf32>
    %cst_28 = arith.constant 3.125000e-02 : f32
    %54 = vector.broadcast %cst_28 : f32 to vector<16x1xf32>
    %55 = arith.mulf %53, %54 : vector<16x1xf32>
    %cst_29 = arith.constant 9.99999974E-6 : f32
    %56 = vector.broadcast %cst_29 : f32 to vector<16x1xf32>
    %57 = arith.addf %55, %56 : vector<16x1xf32>
    %58 = math.rsqrt %57 : vector<16x1xf32>
    %59 = vector.broadcast %58 : vector<16x1xf32> to vector<16x128xf32>
    %60 = arith.mulf %50, %59 : vector<16x128xf32>
    %c0_30 = arith.constant 0 : index
    %c0_31 = arith.constant 0 : index
    %61 = vector.load %arg8[%c0_30, %c0_31] : memref<1x128xf32, #tpu.memory_space<vmem>>, vector<1x128xf32>
    %62 = vector.broadcast %61 : vector<1x128xf32> to vector<16x128xf32>
    %63 = arith.mulf %60, %62 : vector<16x128xf32>
    %c0_32 = arith.constant 0 : index
    %c0_33 = arith.constant 0 : index
    %64 = vector.load %arg9[%c0_32, %c0_33] : memref<1x128xf32, #tpu.memory_space<vmem>>, vector<1x128xf32>
    %65 = vector.broadcast %64 : vector<1x128xf32> to vector<16x128xf32>
    %66 = arith.addf %63, %65 : vector<16x128xf32>
    %c0_34 = arith.constant 0 : index
    %c0_35 = arith.constant 0 : index
    %67 = vector.load %arg10[%c0_34, %c0_35] : memref<128x128xf32, #tpu.memory_space<vmem>>, vector<128x128xf32>
    %cst_36 = arith.constant dense<0.000000e+00> : vector<16x128xf32>
    %68 = tpu.matmul %66, %67, %cst_36 {dimension_numbers = #tpu.dot_dimension_numbers<[1], [0], [0], [1], [0, 0, 1, 1], [], []>} : vector<16x128xf32>, vector<128x128xf32>, vector<16x128xf32> -> vector<16x128xf32>
    %c0_37 = arith.constant 0 : index
    %c0_38 = arith.constant 0 : index
    %69 = vector.load %arg11[%c0_37, %c0_38] : memref<1x128xf32, #tpu.memory_space<vmem>>, vector<1x128xf32>
    %70 = vector.broadcast %69 : vector<1x128xf32> to vector<16x128xf32>
    %71 = arith.addf %68, %70 : vector<16x128xf32>
    %cst_39 = arith.constant 5.000000e-01 : f32
    %72 = vector.broadcast %cst_39 : f32 to vector<16x128xf32>
    %73 = arith.mulf %72, %71 : vector<16x128xf32>
    %cst_40 = arith.constant 0.707106769 : f32
    %74 = vector.broadcast %cst_40 : f32 to vector<16x128xf32>
    %75 = arith.mulf %71, %74 : vector<16x128xf32>
    %76 = math.erf %75 : vector<16x128xf32>
    %cst_41 = arith.constant 1.000000e+00 : f32
    %77 = vector.broadcast %cst_41 : f32 to vector<16x128xf32>
    %78 = arith.addf %77, %76 : vector<16x128xf32>
    %79 = arith.mulf %73, %78 : vector<16x128xf32>
    %c0_42 = arith.constant 0 : index
    %c0_43 = arith.constant 0 : index
    %80 = vector.load %arg12[%c0_42, %c0_43] : memref<128x128xf32, #tpu.memory_space<vmem>>, vector<128x128xf32>
    %cst_44 = arith.constant dense<0.000000e+00> : vector<16x128xf32>
    %81 = tpu.matmul %26, %80, %cst_44 {dimension_numbers = #tpu.dot_dimension_numbers<[1], [0], [0], [1], [0, 0, 1, 1], [], []>} : vector<16x128xf32>, vector<128x128xf32>, vector<16x128xf32> -> vector<16x128xf32>
    %c0_45 = arith.constant 0 : index
    %c0_46 = arith.constant 0 : index
    %82 = vector.load %arg13[%c0_45, %c0_46] : memref<128x128xf32, #tpu.memory_space<vmem>>, vector<128x128xf32>
    %cst_47 = arith.constant dense<0.000000e+00> : vector<16x128xf32>
    %83 = tpu.matmul %79, %82, %cst_47 {dimension_numbers = #tpu.dot_dimension_numbers<[1], [0], [0], [1], [0, 0, 1, 1], [], []>} : vector<16x128xf32>, vector<128x128xf32>, vector<16x128xf32> -> vector<16x128xf32>
    %84 = arith.addf %81, %83 : vector<16x128xf32>
    %c0_48 = arith.constant 0 : index
    %c0_49 = arith.constant 0 : index
    %85 = vector.load %arg14[%c0_48, %c0_49] : memref<1x128xf32, #tpu.memory_space<vmem>>, vector<1x128xf32>
    %86 = vector.broadcast %85 : vector<1x128xf32> to vector<16x128xf32>
    %87 = arith.addf %84, %86 : vector<16x128xf32>
    %88 = arith.negf %87 : vector<16x128xf32>
    %89 = math.exp %88 : vector<16x128xf32>
    %cst_50 = arith.constant 1.000000e+00 : f32
    %90 = vector.broadcast %cst_50 : f32 to vector<16x128xf32>
    %91 = arith.addf %90, %89 : vector<16x128xf32>
    %92 = arith.divf %90, %91 : vector<16x128xf32>
    %c0_51 = arith.constant 0 : index
    %c0_52 = arith.constant 0 : index
    %93 = memref.load %arg15[%c0_51, %c0_52] : memref<1x1xf32, #tpu.memory_space<smem>>
    %94 = arith.subf %79, %26 : vector<16x128xf32>
    %95 = vector.broadcast %93 : f32 to vector<16x128xf32>
    %96 = arith.mulf %95, %94 : vector<16x128xf32>
    %97 = arith.addf %26, %96 : vector<16x128xf32>
    %98 = arith.subf %97, %0 : vector<16x128xf32>
    %99 = arith.mulf %92, %98 : vector<16x128xf32>
    %100 = arith.addf %0, %99 : vector<16x128xf32>
    %c0_53 = arith.constant 0 : index
    %c0_54 = arith.constant 0 : index
    %101 = vector.load %arg16[%c0_53, %c0_54] : memref<16x128xf32, #tpu.memory_space<vmem>>, vector<16x128xf32>
    tpu.vector_store %arg16[%c0_53, %c0_54], %100 {strides = array<i32>} : memref<16x128xf32, #tpu.memory_space<vmem>>, vector<16x128xf32>,
    %c0_55 = arith.constant 0 : index
    %c0_56 = arith.constant 0 : index
    %102 = vector.load %arg17[%c0_55, %c0_56] : memref<16x128xf32, #tpu.memory_space<vmem>>, vector<16x128xf32>
    tpu.vector_store %arg17[%c0_55, %c0_56], %26 {strides = array<i32>} : memref<16x128xf32, #tpu.memory_space<vmem>>, vector<16x128xf32>,
    return
  }
  func.func @transform_0(%arg0: i32) -> (i32, i32) {
    %c0_i32 = arith.constant 0 : i32
    %c0_i32_0 = arith.constant 0 : i32
    return %arg0, %c0_i32 : i32, i32
  }
  func.func @transform_1(%arg0: i32) -> (i32, i32) {
    %c0_i32 = arith.constant 0 : i32
    %c0_i32_0 = arith.constant 0 : i32
    %c0_i32_1 = arith.constant 0 : i32
    return %c0_i32, %c0_i32_0 : i32, i32
  }
  func.func @transform_2(%arg0: i32) -> (i32, i32) {
    %c0_i32 = arith.constant 0 : i32
    %c0_i32_0 = arith.constant 0 : i32
    %c0_i32_1 = arith.constant 0 : i32
    return %c0_i32, %c0_i32_0 : i32, i32
  }
  func.func @transform_3(%arg0: i32) -> (i32, i32) {
    %c0_i32 = arith.constant 0 : i32
    %c0_i32_0 = arith.constant 0 : i32
    %c0_i32_1 = arith.constant 0 : i32
    return %c0_i32, %c0_i32_0 : i32, i32
  }
  func.func @transform_4(%arg0: i32) -> (i32, i32) {
    %c0_i32 = arith.constant 0 : i32
    %c0_i32_0 = arith.constant 0 : i32
    %c0_i32_1 = arith.constant 0 : i32
    return %c0_i32, %c0_i32_0 : i32, i32
  }
  func.func @transform_5(%arg0: i32) -> (i32, i32) {
    %c0_i32 = arith.constant 0 : i32
    %c0_i32_0 = arith.constant 0 : i32
    %c0_i32_1 = arith.constant 0 : i32
    return %c0_i32, %c0_i32_0 : i32, i32
  }
  func.func @transform_6(%arg0: i32) -> (i32, i32) {
    %c0_i32 = arith.constant 0 : i32
    %c0_i32_0 = arith.constant 0 : i32
    %c0_i32_1 = arith.constant 0 : i32
    return %c0_i32, %c0_i32_0 : i32, i32
  }
  func.func @transform_7(%arg0: i32) -> (i32, i32) {
    %c0_i32 = arith.constant 0 : i32
    %c0_i32_0 = arith.constant 0 : i32
    %c0_i32_1 = arith.constant 0 : i32
    return %c0_i32, %c0_i32_0 : i32, i32
  }
  func.func @transform_8(%arg0: i32) -> (i32, i32) {
    %c0_i32 = arith.constant 0 : i32
    %c0_i32_0 = arith.constant 0 : i32
    %c0_i32_1 = arith.constant 0 : i32
    return %c0_i32, %c0_i32_0 : i32, i32
  }
  func.func @transform_9(%arg0: i32) -> (i32, i32) {
    %c0_i32 = arith.constant 0 : i32
    %c0_i32_0 = arith.constant 0 : i32
    %c0_i32_1 = arith.constant 0 : i32
    return %c0_i32, %c0_i32_0 : i32, i32
  }
  func.func @transform_10(%arg0: i32) -> (i32, i32) {
    %c0_i32 = arith.constant 0 : i32
    %c0_i32_0 = arith.constant 0 : i32
    %c0_i32_1 = arith.constant 0 : i32
    return %c0_i32, %c0_i32_0 : i32, i32
  }
  func.func @transform_11(%arg0: i32) -> (i32, i32) {
    %c0_i32 = arith.constant 0 : i32
    %c0_i32_0 = arith.constant 0 : i32
    %c0_i32_1 = arith.constant 0 : i32
    return %c0_i32, %c0_i32_0 : i32, i32
  }
  func.func @transform_12(%arg0: i32) -> (i32, i32) {
    %c0_i32 = arith.constant 0 : i32
    %c0_i32_0 = arith.constant 0 : i32
    %c0_i32_1 = arith.constant 0 : i32
    return %c0_i32, %c0_i32_0 : i32, i32
  }
  func.func @transform_13(%arg0: i32) -> (i32, i32) {
    %c0_i32 = arith.constant 0 : i32
    %c0_i32_0 = arith.constant 0 : i32
    %c0_i32_1 = arith.constant 0 : i32
    return %c0_i32, %c0_i32_0 : i32, i32
  }
  func.func @transform_14(%arg0: i32) -> (i32, i32) {
    %c0_i32 = arith.constant 0 : i32
    %c0_i32_0 = arith.constant 0 : i32
    %c0_i32_1 = arith.constant 0 : i32
    return %c0_i32, %c0_i32_0 : i32, i32
  }
  func.func @transform_15(%arg0: i32) -> (i32, i32) {
    %c0_i32 = arith.constant 0 : i32
    %c0_i32_0 = arith.constant 0 : i32
    return %arg0, %c0_i32 : i32, i32
  }
  func.func @transform_16(%arg0: i32) -> (i32, i32) {
    %c0_i32 = arith.constant 0 : i32
    %c0_i32_0 = arith.constant 0 : i32
    return %arg0, %c0_i32 : i32, i32
  }
}

</mosaic_0001>

<llo_original>
// kernel: tpu_custom_call.1
$region0: #{tpu_custom_call.1}
  #allocation0 [shape = 'u32[]', space=smem, size = 0x4, offset = 0x4, fixed_abs, tag = 'smem constant byte address 0x4 - core index']
  #allocation1 [shape = 'u32[72,128]{1,0:T(1,128)}', space=vmem, size = 0x9000, scoped, tag = 'internal scratch']
  #allocation2 [shape = 'f32[1,1]{1,0:T(1,128)S(6)}', space=smem, size = 0x200, scoped, tag = 'scoped memory for tpu_custom_call.1']
  %s0 = inlined_call_operand.hbm [shape: f32[16,128], index: 0, kind: input, shape index: {}]
  %s1 = inlined_call_operand.hbm [shape: f32[128,128], index: 1, kind: input, shape index: {}]
  %s2 = inlined_call_operand.vmem [shape: f32[1,128], index: 2, kind: input, shape index: {}]
  %s3 = inlined_call_operand.hbm [shape: f32[128,128], index: 3, kind: input, shape index: {}]
  %s4 = inlined_call_operand.vmem [shape: f32[1,128], index: 4, kind: input, shape index: {}]
  %s5 = inlined_call_operand.hbm [shape: f32[128,128], index: 5, kind: input, shape index: {}]
  %s6 = inlined_call_operand.vmem [shape: f32[1,128], index: 6, kind: input, shape index: {}]
  %s7 = inlined_call_operand.vmem [shape: f32[1,128], index: 7, kind: input, shape index: {}]
  %s8 = inlined_call_operand.vmem [shape: f32[1,128], index: 8, kind: input, shape index: {}]
  %s9 = inlined_call_operand.hbm [shape: f32[128,128], index: 9, kind: input, shape index: {}]
  %s10 = inlined_call_operand.vmem [shape: f32[1,128], index: 10, kind: input, shape index: {}]
  %s11 = inlined_call_operand.hbm [shape: f32[128,128], index: 11, kind: input, shape index: {}]
  %s12 = inlined_call_operand.hbm [shape: f32[128,128], index: 12, kind: input, shape index: {}]
  %s13 = inlined_call_operand.vmem [shape: f32[1,128], index: 13, kind: input, shape index: {}]
  %s14 = inlined_call_operand.<no memory space> [shape: f32[1,1], index: 14, kind: input, shape index: {}]
  %s15 = inlined_call_operand.hbm [shape: f32[16,128], index: 15, kind: output, shape index: {0}]
  %s16 = inlined_call_operand.hbm [shape: f32[16,128], index: 16, kind: output, shape index: {1}]
  %17 = xla_tuple %s15, %s16
  %s18 = sld [smem:[#allocation0]]
  $region106: #{tpu_custom_call.1} parent=0
    _
  %s20 = ssub.s32 1, %s18
  %s21 = scalar_select 0, %s20, %s18
  %22 = sst [smem:[#allocation2]] %s14
  $region1: #{tpu_custom_call.1} parent=0
    #allocation3 [shape = 'u8[8192]{0}', space=vmem, size = 0x2000, scoped, tag = 'input window, operand 0, single buffered']
    #allocation4 [shape = 's32[1]{0}', space=sflag, size = 0x4, scoped, tag = 'scoped memory for tpu_custom_call.1']
    #allocation5 [shape = 's32[1]{0}', space=sflag, size = 0x4, scoped, tag = 'scoped memory for tpu_custom_call.1']
    #allocation6 [shape = 'u8[65536]{0}', space=vmem, size = 0x10000, scoped, tag = 'input window, operand 1, single buffered']
    #allocation7 [shape = 's32[1]{0}', space=sflag, size = 0x4, scoped, tag = 'scoped memory for tpu_custom_call.1']
    #allocation8 [shape = 'u8[65536]{0}', space=vmem, size = 0x10000, scoped, tag = 'input window, operand 3, single buffered']
    #allocation9 [shape = 'u8[65536]{0}', space=vmem, size = 0x10000, scoped, tag = 'input window, operand 5, single buffered']
    #allocation10 [shape = 's32[1]{0}', space=sflag, size = 0x4, scoped, tag = 'scoped memory for tpu_custom_call.1']
    #allocation11 [shape = 'u8[65536]{0}', space=vmem, size = 0x10000, scoped, tag = 'input window, operand 9, single buffered']
    #allocation12 [shape = 'u8[65536]{0}', space=vmem, size = 0x10000, scoped, tag = 'input window, operand 11, single buffered']
    #allocation13 [shape = 's32[1]{0}', space=sflag, size = 0x4, scoped, tag = 'scoped memory for tpu_custom_call.1']
    #allocation14 [shape = 'u8[65536]{0}', space=vmem, size = 0x10000, scoped, tag = 'input window, operand 12, single buffered']
    #allocation15 [shape = 'u8[8192]{0}', space=vmem, size = 0x2000, scoped, tag = 'output window, operand 0, single buffered']
    #allocation16 [shape = 'u8[8192]{0}', space=vmem, size = 0x2000, scoped, tag = 'output window, operand 1, single buffered']
    #allocation17 [shape = 's32[1]{0}', space=sflag, size = 0x4, scoped, tag = 'scoped memory for tpu_custom_call.1']
    %23 = vsyncpa [#allocation4], 0
    %24 = vsyncpa [#allocation7], 0
    %25 = vsyncpa [#allocation10], 0
    %26 = vsyncpa [#allocation13], 0
    %27 = vsyncpa [#allocation5], 0
    %28 = vsyncpa [#allocation17], 0
    // Predicated region
    $region2: #{tpu_custom_call.1} parent=1 // pred_check
      _
    $region3: #{tpu_custom_call.1} parent=1 // pred_check_branch
      %30 = sbr.rel (0) target = $region5
    $region4: #{tpu_custom_call.1} parent=1 // pred_region
      %32 = vsyncadd [#allocation4], 0
      %s33 = sshll.u32 %s0, 4
      %s34 = int_to_ptr.hbm [resolvable:$true] %s33
      %s35 = sshll.u32 [#allocation3], 4
      %s36 = int_to_ptr.vmem [resolvable:$true] %s35
      %41 = dma.hbm_to_vmem [thread:$0]  %s34, 256, %s36, [#allocation4], 128, 128, 8
    $region5: #{tpu_custom_call.1} parent=1 // pred_fallthru
      _
    // Predicated region
    $region6: #{tpu_custom_call.1} parent=1 // pred_check
      _
    $region7: #{tpu_custom_call.1} parent=1 // pred_check_branch
      %43 = sbr.rel (0) target = $region9
    $region8: #{tpu_custom_call.1} parent=1 // pred_region
      %45 = vsyncadd [#allocation7], 0
      %s46 = sshll.u32 %s1, 4
      %s47 = int_to_ptr.hbm [resolvable:$true] %s46
      %s48 = sshll.u32 [#allocation6], 4
      %s49 = int_to_ptr.vmem [resolvable:$true] %s48
      %54 = dma.hbm_to_vmem [thread:$0]  %s47, 2048, %s49, [#allocation7], 128, 128, 8
    $region9: #{tpu_custom_call.1} parent=1 // pred_fallthru
      _
    // Predicated region
    $region10: #{tpu_custom_call.1} parent=1 // pred_check
      _
    $region11: #{tpu_custom_call.1} parent=1 // pred_check_branch
      %56 = sbr.rel (0) target = $region13
    $region12: #{tpu_custom_call.1} parent=1 // pred_region
      _
    $region13: #{tpu_custom_call.1} parent=1 // pred_fallthru
      _
    // Predicated region
    $region14: #{tpu_custom_call.1} parent=1 // pred_check
      _
    $region15: #{tpu_custom_call.1} parent=1 // pred_check_branch
      %58 = sbr.rel (0) target = $region17
    $region16: #{tpu_custom_call.1} parent=1 // pred_region
      %60 = vsyncadd [#allocation7], 0
      %s61 = sshll.u32 %s3, 4
      %s62 = int_to_ptr.hbm [resolvable:$true] %s61
      %s63 = sshll.u32 [#allocation8], 4
      %s64 = int_to_ptr.vmem [resolvable:$true] %s63
      %69 = dma.hbm_to_vmem [thread:$0]  %s62, 2048, %s64, [#allocation7], 128, 128, 8
    $region17: #{tpu_custom_call.1} parent=1 // pred_fallthru
      _
    // Predicated region
    $region18: #{tpu_custom_call.1} parent=1 // pred_check
      _
    $region19: #{tpu_custom_call.1} parent=1 // pred_check_branch
      %71 = sbr.rel (0) target = $region21
    $region20: #{tpu_custom_call.1} parent=1 // pred_region
      _
    $region21: #{tpu_custom_call.1} parent=1 // pred_fallthru
      _
    // Predicated region
    $region22: #{tpu_custom_call.1} parent=1 // pred_check
      _
    $region23: #{tpu_custom_call.1} parent=1 // pred_check_branch
      %73 = sbr.rel (0) target = $region25
    $region24: #{tpu_custom_call.1} parent=1 // pred_region
      %75 = vsyncadd [#allocation10], 0
      %s76 = sshll.u32 %s5, 4
      %s77 = int_to_ptr.hbm [resolvable:$true] %s76
      %s78 = sshll.u32 [#allocation9], 4
      %s79 = int_to_ptr.vmem [resolvable:$true] %s78
      %84 = dma.hbm_to_vmem [thread:$0]  %s77, 2048, %s79, [#allocation10], 128, 128, 8
    $region25: #{tpu_custom_call.1} parent=1 // pred_fallthru
      _
    // Predicated region
    $region26: #{tpu_custom_call.1} parent=1 // pred_check
      _
    $region27: #{tpu_custom_call.1} parent=1 // pred_check_branch
      %86 = sbr.rel (0) target = $region29
    $region28: #{tpu_custom_call.1} parent=1 // pred_region
      _
    $region29: #{tpu_custom_call.1} parent=1 // pred_fallthru
      _
    // Predicated region
    $region30: #{tpu_custom_call.1} parent=1 // pred_check
      _
    $region31: #{tpu_custom_call.1} parent=1 // pred_check_branch
      %88 = sbr.rel (0) target = $region33
    $region32: #{tpu_custom_call.1} parent=1 // pred_region
      _
    $region33: #{tpu_custom_call.1} parent=1 // pred_fallthru
      _
    // Predicated region
    $region34: #{tpu_custom_call.1} parent=1 // pred_check
      _
    $region35: #{tpu_custom_call.1} parent=1 // pred_check_branch
      %90 = sbr.rel (0) target = $region37
    $region36: #{tpu_custom_call.1} parent=1 // pred_region
      _
    $region37: #{tpu_custom_call.1} parent=1 // pred_fallthru
      _
    // Predicated region
    $region38: #{tpu_custom_call.1} parent=1 // pred_check
      _
    $region39: #{tpu_custom_call.1} parent=1 // pred_check_branch
      %92 = sbr.rel (0) target = $region41
    $region40: #{tpu_custom_call.1} parent=1 // pred_region
      %94 = vsyncadd [#allocation10], 0
      %s95 = sshll.u32 %s9, 4
      %s96 = int_to_ptr.hbm [resolvable:$true] %s95
      %s97 = sshll.u32 [#allocation11], 4
      %s98 = int_to_ptr.vmem [resolvable:$true] %s97
      %103 = dma.hbm_to_vmem [thread:$0]  %s96, 2048, %s98, [#allocation10], 128, 128, 8
    $region41: #{tpu_custom_call.1} parent=1 // pred_fallthru
      _
    // Predicated region
    $region42: #{tpu_custom_call.1} parent=1 // pred_check
      _
    $region43: #{tpu_custom_call.1} parent=1 // pred_check_branch
      %105 = sbr.rel (0) target = $region45
    $region44: #{tpu_custom_call.1} parent=1 // pred_region
      _
    $region45: #{tpu_custom_call.1} parent=1 // pred_fallthru
      _
    // Predicated region
    $region46: #{tpu_custom_call.1} parent=1 // pred_check
      _
    $region47: #{tpu_custom_call.1} parent=1 // pred_check_branch
      %107 = sbr.rel (0) target = $region49
    $region48: #{tpu_custom_call.1} parent=1 // pred_region
      %109 = vsyncadd [#allocation13], 0
      %s110 = sshll.u32 %s11, 4
      %s111 = int_to_ptr.hbm [resolvable:$true] %s110
      %s112 = sshll.u32 [#allocation12], 4
      %s113 = int_to_ptr.vmem [resolvable:$true] %s112
      %118 = dma.hbm_to_vmem [thread:$0]  %s111, 2048, %s113, [#allocation13], 128, 128, 8
    $region49: #{tpu_custom_call.1} parent=1 // pred_fallthru
      _
    // Predicated region
    $region50: #{tpu_custom_call.1} parent=1 // pred_check
      _
    $region51: #{tpu_custom_call.1} parent=1 // pred_check_branch
      %120 = sbr.rel (0) target = $region53
    $region52: #{tpu_custom_call.1} parent=1 // pred_region
      %122 = vsyncadd [#allocation13], 0
      %s123 = sshll.u32 %s12, 4
      %s124 = int_to_ptr.hbm [resolvable:$true] %s123
      %s125 = sshll.u32 [#allocation14], 4
      %s126 = int_to_ptr.vmem [resolvable:$true] %s125
      %131 = dma.hbm_to_vmem [thread:$0]  %s124, 2048, %s126, [#allocation13], 128, 128, 8
    $region53: #{tpu_custom_call.1} parent=1 // pred_fallthru
      _
    // Predicated region
    $region54: #{tpu_custom_call.1} parent=1 // pred_check
      _
    $region55: #{tpu_custom_call.1} parent=1 // pred_check_branch
      %133 = sbr.rel (0) target = $region57
    $region56: #{tpu_custom_call.1} parent=1 // pred_region
      _
    $region57: #{tpu_custom_call.1} parent=1 // pred_fallthru
      _
    // Predicated region
    $region58: #{tpu_custom_call.1} parent=1 // pred_check
      _
    $region59: #{tpu_custom_call.1} parent=1 // pred_check_branch
      %135 = sbr.rel (0) target = $region61
    $region60: #{tpu_custom_call.1} parent=1 // pred_region
      _
    $region61: #{tpu_custom_call.1} parent=1 // pred_fallthru
      _
    // Predicated region
    $region62: #{tpu_custom_call.1} parent=1 // pred_check
      _
    $region63: #{tpu_custom_call.1} parent=1 // pred_check_branch
      %137 = sbr.rel (0) target = $region65
    $region64: #{tpu_custom_call.1} parent=1 // pred_region
      %139 = dma.done [#allocation4], 256
    $region65: #{tpu_custom_call.1} parent=1 // pred_fallthru
      _
    // Predicated region
    $region66: #{tpu_custom_call.1} parent=1 // pred_check
      _
    $region67: #{tpu_custom_call.1} parent=1 // pred_check_branch
      %141 = sbr.rel (0) target = $region69
    $region68: #{tpu_custom_call.1} parent=1 // pred_region
      %143 = dma.done [#allocation7], 2048
    $region69: #{tpu_custom_call.1} parent=1 // pred_fallthru
      _
    // Predicated region
    $region70: #{tpu_custom_call.1} parent=1 // pred_check
      _
    $region71: #{tpu_custom_call.1} parent=1 // pred_check_branch
      %145 = sbr.rel (0) target = $region73
    $region72: #{tpu_custom_call.1} parent=1 // pred_region
      %147 = dma.done [#allocation7], 2048
    $region73: #{tpu_custom_call.1} parent=1 // pred_fallthru
      _
    // Predicated region
    $region74: #{tpu_custom_call.1} parent=1 // pred_check
      _
    $region75: #{tpu_custom_call.1} parent=1 // pred_check_branch
      %149 = sbr.rel (0) target = $region77
    $region76: #{tpu_custom_call.1} parent=1 // pred_region
      %151 = dma.done [#allocation10], 2048
    $region77: #{tpu_custom_call.1} parent=1 // pred_fallthru
      _
    // Predicated region
    $region78: #{tpu_custom_call.1} parent=1 // pred_check
      _
    $region79: #{tpu_custom_call.1} parent=1 // pred_check_branch
      %153 = sbr.rel (0) target = $region81
    $region80: #{tpu_custom_call.1} parent=1 // pred_region
      %155 = dma.done [#allocation10], 2048
    $region81: #{tpu_custom_call.1} parent=1 // pred_fallthru
      _
    // Predicated region
    $region82: #{tpu_custom_call.1} parent=1 // pred_check
      _
    $region83: #{tpu_custom_call.1} parent=1 // pred_check_branch
      %157 = sbr.rel (0) target = $region85
    $region84: #{tpu_custom_call.1} parent=1 // pred_region
      %159 = dma.done [#allocation13], 2048
    $region85: #{tpu_custom_call.1} parent=1 // pred_fallthru
      _
    // Predicated region
    $region86: #{tpu_custom_call.1} parent=1 // pred_check
      _
    $region87: #{tpu_custom_call.1} parent=1 // pred_check_branch
      %161 = sbr.rel (0) target = $region89
    $region88: #{tpu_custom_call.1} parent=1 // pred_region
      %163 = dma.done [#allocation13], 2048
    $region89: #{tpu_custom_call.1} parent=1 // pred_fallthru
      _
    %v164 = vld [vmem:[#allocation3] sm:$0xff]
    %v165 = vld [vmem:[#allocation3 + $0x8] sm:$0xff]
    %v166 = vld [vmem:[#allocation6] sm:$0xff]
    %v167 = vld [vmem:[#allocation6 + $0x8] sm:$0xff]
    %v168 = vld [vmem:[#allocation6 + $0x10] sm:$0xff]
    %v169 = vld [vmem:[#allocation6 + $0x18] sm:$0xff]
    %v170 = vld [vmem:[#allocation6 + $0x20] sm:$0xff]
    %v171 = vld [vmem:[#allocation6 + $0x28] sm:$0xff]
    %v172 = vld [vmem:[#allocation6 + $0x30] sm:$0xff]
    %v173 = vld [vmem:[#allocation6 + $0x38] sm:$0xff]
    %v174 = vld [vmem:[#allocation6 + $0x40] sm:$0xff]
    %v175 = vld [vmem:[#allocation6 + $0x48] sm:$0xff]
    %v176 = vld [vmem:[#allocation6 + $0x50] sm:$0xff]
    %v177 = vld [vmem:[#allocation6 + $0x58] sm:$0xff]
    %v178 = vld [vmem:[#allocation6 + $0x60] sm:$0xff]
    %v179 = vld [vmem:[#allocation6 + $0x68] sm:$0xff]
    %v180 = vld [vmem:[#allocation6 + $0x70] sm:$0xff]
    %v181 = vld [vmem:[#allocation6 + $0x78] sm:$0xff]
    %v182 = vld [vmem:[%s2] sm:$0x1]
    %v184 = vperm.slane %v182, 0
    %186 = vmatpush.msra.mxu0 %v181
    %187 = vmatpush.msra.mxu0 %v180
    %188 = vmatpush.msra.mxu0 %v179
    %189 = vmatpush.msra.mxu0 %v178
    %190 = vmatpush.msra.mxu0 %v177
    %191 = vmatpush.msra.mxu0 %v176
    %192 = vmatpush.msra.mxu0 %v175
    %193 = vmatpush.msra.mxu0 %v174
    %194 = vmatpush.msra.mxu0 %v173
    %195 = vmatpush.msra.mxu0 %v172
    %196 = vmatpush.msra.mxu0 %v171
    %197 = vmatpush.msra.mxu0 %v170
    %198 = vmatpush.msra.mxu0 %v169
    %199 = vmatpush.msra.mxu0 %v168
    %200 = vmatpush.msra.mxu0 %v167
    %201 = vmatpush.msra.mxu0 %v166
    %202 = vmatmul.f32.gmra.mxu0 %v164
    %v203 = vpop.f32.mrf.mxu0
    %v204 = vadd.f32 %v184, %v203
    %205 = vmatmul.f32.gmra.mxu0 %v165
    %v206 = vpop.f32.mrf.mxu0
    %v207 = vadd.f32 %v184, %v206
    %208 = vdwg.mxu0
    %v209 = vmul.f32 %v204, 0.5
    %v210 = vmul.f32 %v207, 0.5
    %v211 = vmul.f32 %v204, 0.70710677
    %v212 = vmul.f32 %v207, 0.70710677
    %v213 = vmul.f32 %v211, %v211
    %v214 = vmin.f32 16.0, %v213
    %v215 = vmul.f32 %v214, 2.1237322e-06
    %v216 = vadd.f32 %v215, 0.00028619796
    %v217 = vmul.f32 %v214, %v216
    %v218 = vadd.f32 %v217, 0.0036580483
    %v219 = vmul.f32 %v214, %v218
    %v220 = vadd.f32 %v219, 0.05243302
    %v221 = vmul.f32 %v214, %v220
    %v222 = vadd.f32 %v221, 0.18741608
    %v223 = vmul.f32 %v214, %v222
    %v224 = vadd.f32 %v223, 1.1283791
    %v225 = vmul.f32 %v211, %v224
    %v226 = vmul.f32 %v214, 3.8918573e-05
    %v227 = vadd.f32 %v226, 0.001143296
    %v228 = vmul.f32 %v214, %v227
    %v229 = vadd.f32 %v228, 0.014752088
    %v230 = vmul.f32 %v214, %v229
    %v231 = vadd.f32 %v230, 0.112945676
    %v232 = vmul.f32 %v214, %v231
    %v233 = vadd.f32 %v232, 0.4994258
    %v234 = vmul.f32 %v214, %v233
    %v235 = vadd.f32 %v234, 1.0
    %v236 = vrcp.pop %v235
    %v237 = vmul.f32 %v235, %v236
    %v238 = vsub.f32 1.0, %v237
    %v239 = vmul.f32 %v236, %v238
    %v240 = vadd.f32 %v236, %v239
    %vm241 = vweird.f32 %v235
    %vm242 = vweird.f32 %v236
    %vm243 = vmor %vm241, %vm242
    %v244 = vsel %vm243, %v236, %v240
    %v245 = vand.u32 2147483647, %v235
    %vm246 = vcmp.eq.f32.partialorder %v245, 8.507059e+37
    %v247 = vand.u32 %v235, 2147483648
    %v248 = vor.u32 1.1754944e-38, %v247
    %v249 = vsel %vm246, %v248, %v244
    %v250 = vmul.f32 %v225, %v249
    %v251 = vmin.f32 %v250, 1.0
    %v252 = vmax.f32 %v251, -1.0
    %v253 = vmul.f32 %v212, %v212
    %v254 = vmin.f32 16.0, %v253
    %v255 = vmul.f32 %v254, 2.1237322e-06
    %v256 = vadd.f32 %v255, 0.00028619796
    %v257 = vmul.f32 %v254, %v256
    %v258 = vadd.f32 %v257, 0.0036580483
    %v259 = vmul.f32 %v254, %v258
    %v260 = vadd.f32 %v259, 0.05243302
    %v261 = vmul.f32 %v254, %v260
    %v262 = vadd.f32 %v261, 0.18741608
    %v263 = vmul.f32 %v254, %v262
    %v264 = vadd.f32 %v263, 1.1283791
    %v265 = vmul.f32 %v212, %v264
    %v266 = vmul.f32 %v254, 3.8918573e-05
    %v267 = vadd.f32 %v266, 0.001143296
    %v268 = vmul.f32 %v254, %v267
    %v269 = vadd.f32 %v268, 0.014752088
    %v270 = vmul.f32 %v254, %v269
    %v271 = vadd.f32 %v270, 0.112945676
    %v272 = vmul.f32 %v254, %v271
    %v273 = vadd.f32 %v272, 0.4994258
    %v274 = vmul.f32 %v254, %v273
    %v275 = vadd.f32 %v274, 1.0
    %v276 = vrcp.pop %v275
    %v277 = vmul.f32 %v275, %v276
    %v278 = vsub.f32 1.0, %v277
    %v279 = vmul.f32 %v276, %v278
    %v280 = vadd.f32 %v276, %v279
    %vm281 = vweird.f32 %v275
    %vm282 = vweird.f32 %v276
    %vm283 = vmor %vm281, %vm282
    %v284 = vsel %vm283, %v276, %v280
    %v285 = vand.u32 2147483647, %v275
    %vm286 = vcmp.eq.f32.partialorder %v285, 8.507059e+37
    %v287 = vand.u32 %v275, 2147483648
    %v288 = vor.u32 1.1754944e-38, %v287
    %v289 = vsel %vm286, %v288, %v284
    %v290 = vmul.f32 %v265, %v289
    %v291 = vmin.f32 %v290, 1.0
    %v292 = vmax.f32 %v291, -1.0
    %v293 = vadd.f32 %v252, 1.0
    %v294 = vadd.f32 %v292, 1.0
    %v295 = vmul.f32 %v209, %v293
    %v296 = vmul.f32 %v210, %v294
    %v297 = vld [vmem:[#allocation8] sm:$0xff]
    %v298 = vld [vmem:[#allocation8 + $0x8] sm:$0xff]
    %v299 = vld [vmem:[#allocation8 + $0x10] sm:$0xff]
    %v300 = vld [vmem:[#allocation8 + $0x18] sm:$0xff]
    %v301 = vld [vmem:[#allocation8 + $0x20] sm:$0xff]
    %v302 = vld [vmem:[#allocation8 + $0x28] sm:$0xff]
    %v303 = vld [vmem:[#allocation8 + $0x30] sm:$0xff]
    %v304 = vld [vmem:[#allocation8 + $0x38] sm:$0xff]
    %v305 = vld [vmem:[#allocation8 + $0x40] sm:$0xff]
    %v306 = vld [vmem:[#allocation8 + $0x48] sm:$0xff]
    %v307 = vld [vmem:[#allocation8 + $0x50] sm:$0xff]
    %v308 = vld [vmem:[#allocation8 + $0x58] sm:$0xff]
    %v309 = vld [vmem:[#allocation8 + $0x60] sm:$0xff]
    %v310 = vld [vmem:[#allocation8 + $0x68] sm:$0xff]
    %v311 = vld [vmem:[#allocation8 + $0x70] sm:$0xff]
    %v312 = vld [vmem:[#allocation8 + $0x78] sm:$0xff]
    %v313 = vld [vmem:[%s4] sm:$0x1]
    %v315 = vperm.slane %v313, 0
    %317 = vmatpush.msra.mxu0 %v312
    %318 = vmatpush.msra.mxu0 %v311
    %319 = vmatpush.msra.mxu0 %v310
    %320 = vmatpush.msra.mxu0 %v309
    %321 = vmatpush.msra.mxu0 %v308
    %322 = vmatpush.msra.mxu0 %v307
    %323 = vmatpush.msra.mxu0 %v306
    %324 = vmatpush.msra.mxu0 %v305
    %325 = vmatpush.msra.mxu0 %v304
    %326 = vmatpush.msra.mxu0 %v303
    %327 = vmatpush.msra.mxu0 %v302
    %328 = vmatpush.msra.mxu0 %v301
    %329 = vmatpush.msra.mxu0 %v300
    %330 = vmatpush.msra.mxu0 %v299
    %331 = vmatpush.msra.mxu0 %v298
    %332 = vmatpush.msra.mxu0 %v297
    %333 = vmatmul.f32.gmra.mxu0 %v295
    %v334 = vpop.f32.mrf.mxu0
    %v335 = vadd.f32 %v315, %v334
    %336 = vmatmul.f32.gmra.mxu0 %v296
    %v337 = vpop.f32.mrf.mxu0
    %v338 = vadd.f32 %v315, %v337
    %339 = vdwg.mxu0
    %v340 = vmul.f32 %v335, 0.5
    %v341 = vmul.f32 %v338, 0.5
    %v342 = vmul.f32 %v335, 0.70710677
    %v343 = vmul.f32 %v338, 0.70710677
    %v344 = vmul.f32 %v342, %v342
    %v345 = vmin.f32 16.0, %v344
    %v346 = vmul.f32 %v345, 2.1237322e-06
    %v347 = vadd.f32 %v346, 0.00028619796
    %v348 = vmul.f32 %v345, %v347
    %v349 = vadd.f32 %v348, 0.0036580483
    %v350 = vmul.f32 %v345, %v349
    %v351 = vadd.f32 %v350, 0.05243302
    %v352 = vmul.f32 %v345, %v351
    %v353 = vadd.f32 %v352, 0.18741608
    %v354 = vmul.f32 %v345, %v353
    %v355 = vadd.f32 %v354, 1.1283791
    %v356 = vmul.f32 %v342, %v355
    %v357 = vmul.f32 %v345, 3.8918573e-05
    %v358 = vadd.f32 %v357, 0.001143296
    %v359 = vmul.f32 %v345, %v358
    %v360 = vadd.f32 %v359, 0.014752088
    %v361 = vmul.f32 %v345, %v360
    %v362 = vadd.f32 %v361, 0.112945676
    %v363 = vmul.f32 %v345, %v362
    %v364 = vadd.f32 %v363, 0.4994258
    %v365 = vmul.f32 %v345, %v364
    %v366 = vadd.f32 %v365, 1.0
    %v367 = vrcp.pop %v366
    %v368 = vmul.f32 %v366, %v367
    %v369 = vsub.f32 1.0, %v368
    %v370 = vmul.f32 %v367, %v369
    %v371 = vadd.f32 %v367, %v370
    %vm372 = vweird.f32 %v366
    %vm373 = vweird.f32 %v367
    %vm374 = vmor %vm372, %vm373
    %v375 = vsel %vm374, %v367, %v371
    %v376 = vand.u32 2147483647, %v366
    %vm377 = vcmp.eq.f32.partialorder %v376, 8.507059e+37
    %v378 = vand.u32 %v366, 2147483648
    %v379 = vor.u32 1.1754944e-38, %v378
    %v380 = vsel %vm377, %v379, %v375
    %v381 = vmul.f32 %v356, %v380
    %v382 = vmin.f32 %v381, 1.0
    %v383 = vmax.f32 %v382, -1.0
    %v384 = vmul.f32 %v343, %v343
    %v385 = vmin.f32 16.0, %v384
    %v386 = vmul.f32 %v385, 2.1237322e-06
    %v387 = vadd.f32 %v386, 0.00028619796
    %v388 = vmul.f32 %v385, %v387
    %v389 = vadd.f32 %v388, 0.0036580483
    %v390 = vmul.f32 %v385, %v389
    %v391 = vadd.f32 %v390, 0.05243302
    %v392 = vmul.f32 %v385, %v391
    %v393 = vadd.f32 %v392, 0.18741608
    %v394 = vmul.f32 %v385, %v393
    %v395 = vadd.f32 %v394, 1.1283791
    %v396 = vmul.f32 %v343, %v395
    %v397 = vmul.f32 %v385, 3.8918573e-05
    %v398 = vadd.f32 %v397, 0.001143296
    %v399 = vmul.f32 %v385, %v398
    %v400 = vadd.f32 %v399, 0.014752088
    %v401 = vmul.f32 %v385, %v400
    %v402 = vadd.f32 %v401, 0.112945676
    %v403 = vmul.f32 %v385, %v402
    %v404 = vadd.f32 %v403, 0.4994258
    %v405 = vmul.f32 %v385, %v404
    %v406 = vadd.f32 %v405, 1.0
    %v407 = vrcp.pop %v406
    %v408 = vmul.f32 %v406, %v407
    %v409 = vsub.f32 1.0, %v408
    %v410 = vmul.f32 %v407, %v409
    %v411 = vadd.f32 %v407, %v410
    %vm412 = vweird.f32 %v406
    %vm413 = vweird.f32 %v407
    %vm414 = vmor %vm412, %vm413
    %v415 = vsel %vm414, %v407, %v411
    %v416 = vand.u32 2147483647, %v406
    %vm417 = vcmp.eq.f32.partialorder %v416, 8.507059e+37
    %v418 = vand.u32 %v406, 2147483648
    %v419 = vor.u32 1.1754944e-38, %v418
    %v420 = vsel %vm417, %v419, %v415
    %v421 = vmul.f32 %v396, %v420
    %v422 = vmin.f32 %v421, 1.0
    %v423 = vmax.f32 %v422, -1.0
    %v424 = vadd.f32 %v383, 1.0
    %v425 = vadd.f32 %v423, 1.0
    %v426 = vmul.f32 %v340, %v424
    %v427 = vmul.f32 %v341, %v425
    %v428 = vld [vmem:[#allocation9] sm:$0xff]
    %v429 = vld [vmem:[#allocation9 + $0x8] sm:$0xff]
    %v430 = vld [vmem:[#allocation9 + $0x10] sm:$0xff]
    %v431 = vld [vmem:[#allocation9 + $0x18] sm:$0xff]
    %v432 = vld [vmem:[#allocation9 + $0x20] sm:$0xff]
    %v433 = vld [vmem:[#allocation9 + $0x28] sm:$0xff]
    %v434 = vld [vmem:[#allocation9 + $0x30] sm:$0xff]
    %v435 = vld [vmem:[#allocation9 + $0x38] sm:$0xff]
    %v436 = vld [vmem:[#allocation9 + $0x40] sm:$0xff]
    %v437 = vld [vmem:[#allocation9 + $0x48] sm:$0xff]
    %v438 = vld [vmem:[#allocation9 + $0x50] sm:$0xff]
    %v439 = vld [vmem:[#allocation9 + $0x58] sm:$0xff]
    %v440 = vld [vmem:[#allocation9 + $0x60] sm:$0xff]
    %v441 = vld [vmem:[#allocation9 + $0x68] sm:$0xff]
    %v442 = vld [vmem:[#allocation9 + $0x70] sm:$0xff]
    %v443 = vld [vmem:[#allocation9 + $0x78] sm:$0xff]
    %v444 = vld [vmem:[%s6] sm:$0x1]
    %v446 = vperm.slane %v444, 0
    %448 = vmatpush.msra.mxu0 %v443
    %449 = vmatpush.msra.mxu0 %v442
    %450 = vmatpush.msra.mxu0 %v441
    %451 = vmatpush.msra.mxu0 %v440
    %452 = vmatpush.msra.mxu0 %v439
    %453 = vmatpush.msra.mxu0 %v438
    %454 = vmatpush.msra.mxu0 %v437
    %455 = vmatpush.msra.mxu0 %v436
    %456 = vmatpush.msra.mxu0 %v435
    %457 = vmatpush.msra.mxu0 %v434
    %458 = vmatpush.msra.mxu0 %v433
    %459 = vmatpush.msra.mxu0 %v432
    %460 = vmatpush.msra.mxu0 %v431
    %461 = vmatpush.msra.mxu0 %v430
    %462 = vmatpush.msra.mxu0 %v429
    %463 = vmatpush.msra.mxu0 %v428
    %464 = vmatmul.f32.gmra.mxu0 %v164
    %v465 = vpop.f32.mrf.mxu0
    %v466 = vadd.f32 %v446, %v465
    %467 = vmatmul.f32.gmra.mxu0 %v165
    %v468 = vpop.f32.mrf.mxu0
    %v469 = vadd.f32 %v446, %v468
    %470 = vdwg.mxu0
    %v471 = vmul.f32 %v466, 0.5
    %v472 = vmul.f32 %v469, 0.5
    %v473 = vmul.f32 %v466, 0.70710677
    %v474 = vmul.f32 %v469, 0.70710677
    %v475 = vmul.f32 %v473, %v473
    %v476 = vmin.f32 16.0, %v475
    %v477 = vmul.f32 %v476, 2.1237322e-06
    %v478 = vadd.f32 %v477, 0.00028619796
    %v479 = vmul.f32 %v476, %v478
    %v480 = vadd.f32 %v479, 0.0036580483
    %v481 = vmul.f32 %v476, %v480
    %v482 = vadd.f32 %v481, 0.05243302
    %v483 = vmul.f32 %v476, %v482
    %v484 = vadd.f32 %v483, 0.18741608
    %v485 = vmul.f32 %v476, %v484
    %v486 = vadd.f32 %v485, 1.1283791
    %v487 = vmul.f32 %v473, %v486
    %v488 = vmul.f32 %v476, 3.8918573e-05
    %v489 = vadd.f32 %v488, 0.001143296
    %v490 = vmul.f32 %v476, %v489
    %v491 = vadd.f32 %v490, 0.014752088
    %v492 = vmul.f32 %v476, %v491
    %v493 = vadd.f32 %v492, 0.112945676
    %v494 = vmul.f32 %v476, %v493
    %v495 = vadd.f32 %v494, 0.4994258
    %v496 = vmul.f32 %v476, %v495
    %v497 = vadd.f32 %v496, 1.0
    %v498 = vrcp.pop %v497
    %v499 = vmul.f32 %v497, %v498
    %v500 = vsub.f32 1.0, %v499
    %v501 = vmul.f32 %v498, %v500
    %v502 = vadd.f32 %v498, %v501
    %vm503 = vweird.f32 %v497
    %vm504 = vweird.f32 %v498
    %vm505 = vmor %vm503, %vm504
    %v506 = vsel %vm505, %v498, %v502
    %v507 = vand.u32 2147483647, %v497
    %vm508 = vcmp.eq.f32.partialorder %v507, 8.507059e+37
    %v509 = vand.u32 %v497, 2147483648
    %v510 = vor.u32 1.1754944e-38, %v509
    %v511 = vsel %vm508, %v510, %v506
    %v512 = vmul.f32 %v487, %v511
    %v513 = vmin.f32 %v512, 1.0
    %v514 = vmax.f32 %v513, -1.0
    %v515 = vmul.f32 %v474, %v474
    %v516 = vmin.f32 16.0, %v515
    %v517 = vmul.f32 %v516, 2.1237322e-06
    %v518 = vadd.f32 %v517, 0.00028619796
    %v519 = vmul.f32 %v516, %v518
    %v520 = vadd.f32 %v519, 0.0036580483
    %v521 = vmul.f32 %v516, %v520
    %v522 = vadd.f32 %v521, 0.05243302
    %v523 = vmul.f32 %v516, %v522
    %v524 = vadd.f32 %v523, 0.18741608
    %v525 = vmul.f32 %v516, %v524
    %v526 = vadd.f32 %v525, 1.1283791
    %v527 = vmul.f32 %v474, %v526
    %v528 = vmul.f32 %v516, 3.8918573e-05
    %v529 = vadd.f32 %v528, 0.001143296
    %v530 = vmul.f32 %v516, %v529
    %v531 = vadd.f32 %v530, 0.014752088
    %v532 = vmul.f32 %v516, %v531
    %v533 = vadd.f32 %v532, 0.112945676
    %v534 = vmul.f32 %v516, %v533
    %v535 = vadd.f32 %v534, 0.4994258
    %v536 = vmul.f32 %v516, %v535
    %v537 = vadd.f32 %v536, 1.0
    %v538 = vrcp.pop %v537
    %v539 = vmul.f32 %v537, %v538
    %v540 = vsub.f32 1.0, %v539
    %v541 = vmul.f32 %v538, %v540
    %v542 = vadd.f32 %v538, %v541
    %vm543 = vweird.f32 %v537
    %vm544 = vweird.f32 %v538
    %vm545 = vmor %vm543, %vm544
    %v546 = vsel %vm545, %v538, %v542
    %v547 = vand.u32 2147483647, %v537
    %vm548 = vcmp.eq.f32.partialorder %v547, 8.507059e+37
    %v549 = vand.u32 %v537, 2147483648
    %v550 = vor.u32 1.1754944e-38, %v549
    %v551 = vsel %vm548, %v550, %v546
    %v552 = vmul.f32 %v527, %v551
    %v553 = vmin.f32 %v552, 1.0
    %v554 = vmax.f32 %v553, -1.0
    %v555 = vadd.f32 %v514, 1.0
    %v556 = vadd.f32 %v554, 1.0
    %v557 = vmul.f32 %v471, %v555
    %v558 = vmul.f32 %v472, %v556
    %559 = vadd.xlane.f32.xlu0 %v557
    %v560 = vpop.xlane.xlu0 %559
    %561 = vadd.xlane.f32.xlu0 %v558
    %v562 = vpop.xlane.xlu0 %561
    %v563 = vmul.f32 %v560, 0.03125
    %v564 = vmul.f32 %v562, 0.03125
    %v565 = vsub.f32 %v557, %v563
    %v566 = vsub.f32 %v558, %v564
    %v567 = vlaneseq
    %v568 = vand.u32 %v567, 127
    %vm569 = vcmp.lt.s32.totalorder %v568, 32
    %v570 = vsel %vm569, %v565, 0.0
    %v571 = vsel %vm569, %v566, 0.0
    %v572 = vmul.f32 %v570, %v570
    %v573 = vmul.f32 %v571, %v571
    %574 = vadd.xlane.f32.xlu0 %v572
    %v575 = vpop.xlane.xlu0 %574
    %576 = vadd.xlane.f32.xlu0 %v573
    %v577 = vpop.xlane.xlu0 %576
    %v578 = vmul.f32 %v575, 0.03125
    %v579 = vmul.f32 %v577, 0.03125
    %v580 = vadd.f32 %v578, 1e-05
    %v581 = vadd.f32 %v579, 1e-05
    %v582 = vrsqrt.pop %v580
    %v583 = vmul.f32 %v582, %v580
    %v584 = vmul.f32 %v583, %v582
    %v585 = vmul.f32 0.5, %v584
    %v586 = vsub.f32 1.5, %v585
    %v587 = vmul.f32 %v582, %v586
    %vm588 = vweird.f32 %v580
    %vm589 = vweird.f32 %v582
    %vm590 = vmor %vm588, %vm589
    %v591 = vsel %vm590, %v582, %v587
    %v592 = vrsqrt.pop %v581
    %v593 = vmul.f32 %v592, %v581
    %v594 = vmul.f32 %v593, %v592
    %v595 = vmul.f32 0.5, %v594
    %v596 = vsub.f32 1.5, %v595
    %v597 = vmul.f32 %v592, %v596
    %vm598 = vweird.f32 %v581
    %vm599 = vweird.f32 %v592
    %vm600 = vmor %vm598, %vm599
    %v601 = vsel %vm600, %v592, %v597
    %v602 = vmul.f32 %v570, %v591
    %v603 = vmul.f32 %v571, %v601
    %v604 = vld [vmem:[%s7] sm:$0x1]
    %v606 = vperm.slane %v604, 0
    %v608 = vmul.f32 %v602, %v606
    %v609 = vmul.f32 %v603, %v606
    %v610 = vld [vmem:[%s8] sm:$0x1]
    %v612 = vperm.slane %v610, 0
    %v614 = vadd.f32 %v608, %v612
    %v615 = vadd.f32 %v609, %v612
    %v616 = vld [vmem:[#allocation11] sm:$0xff]
    %v617 = vld [vmem:[#allocation11 + $0x8] sm:$0xff]
    %v618 = vld [vmem:[#allocation11 + $0x10] sm:$0xff]
    %v619 = vld [vmem:[#allocation11 + $0x18] sm:$0xff]
    %v620 = vld [vmem:[#allocation11 + $0x20] sm:$0xff]
    %v621 = vld [vmem:[#allocation11 + $0x28] sm:$0xff]
    %v622 = vld [vmem:[#allocation11 + $0x30] sm:$0xff]
    %v623 = vld [vmem:[#allocation11 + $0x38] sm:$0xff]
    %v624 = vld [vmem:[#allocation11 + $0x40] sm:$0xff]
    %v625 = vld [vmem:[#allocation11 + $0x48] sm:$0xff]
    %v626 = vld [vmem:[#allocation11 + $0x50] sm:$0xff]
    %v627 = vld [vmem:[#allocation11 + $0x58] sm:$0xff]
    %v628 = vld [vmem:[#allocation11 + $0x60] sm:$0xff]
    %v629 = vld [vmem:[#allocation11 + $0x68] sm:$0xff]
    %v630 = vld [vmem:[#allocation11 + $0x70] sm:$0xff]
    %v631 = vld [vmem:[#allocation11 + $0x78] sm:$0xff]
    %v632 = vld [vmem:[%s10] sm:$0x1]
    %v634 = vperm.slane %v632, 0
    %636 = vmatpush.msra.mxu0 %v631
    %637 = vmatpush.msra.mxu0 %v630
    %638 = vmatpush.msra.mxu0 %v629
    %639 = vmatpush.msra.mxu0 %v628
    %640 = vmatpush.msra.mxu0 %v627
    %641 = vmatpush.msra.mxu0 %v626
    %642 = vmatpush.msra.mxu0 %v625
    %643 = vmatpush.msra.mxu0 %v624
    %644 = vmatpush.msra.mxu0 %v623
    %645 = vmatpush.msra.mxu0 %v622
    %646 = vmatpush.msra.mxu0 %v621
    %647 = vmatpush.msra.mxu0 %v620
    %648 = vmatpush.msra.mxu0 %v619
    %649 = vmatpush.msra.mxu0 %v618
    %650 = vmatpush.msra.mxu0 %v617
    %651 = vmatpush.msra.mxu0 %v616
    %652 = vmatmul.f32.gmra.mxu0 %v614
    %v653 = vpop.f32.mrf.mxu0
    %v654 = vadd.f32 %v634, %v653
    %655 = vmatmul.f32.gmra.mxu0 %v615
    %v656 = vpop.f32.mrf.mxu0
    %v657 = vadd.f32 %v634, %v656
    %658 = vdwg.mxu0
    %v659 = vmul.f32 %v654, 0.5
    %v660 = vmul.f32 %v657, 0.5
    %v661 = vmul.f32 %v654, 0.70710677
    %v662 = vmul.f32 %v657, 0.70710677
    %v663 = vmul.f32 %v661, %v661
    %v664 = vmin.f32 16.0, %v663
    %v665 = vmul.f32 %v664, 2.1237322e-06
    %v666 = vadd.f32 %v665, 0.00028619796
    %v667 = vmul.f32 %v664, %v666
    %v668 = vadd.f32 %v667, 0.0036580483
    %v669 = vmul.f32 %v664, %v668
    %v670 = vadd.f32 %v669, 0.05243302
    %v671 = vmul.f32 %v664, %v670
    %v672 = vadd.f32 %v671, 0.18741608
    %v673 = vmul.f32 %v664, %v672
    %v674 = vadd.f32 %v673, 1.1283791
    %v675 = vmul.f32 %v661, %v674
    %v676 = vmul.f32 %v664, 3.8918573e-05
    %v677 = vadd.f32 %v676, 0.001143296
    %v678 = vmul.f32 %v664, %v677
    %v679 = vadd.f32 %v678, 0.014752088
    %v680 = vmul.f32 %v664, %v679
    %v681 = vadd.f32 %v680, 0.112945676
    %v682 = vmul.f32 %v664, %v681
    %v683 = vadd.f32 %v682, 0.4994258
    %v684 = vmul.f32 %v664, %v683
    %v685 = vadd.f32 %v684, 1.0
    %v686 = vrcp.pop %v685
    %v687 = vmul.f32 %v685, %v686
    %v688 = vsub.f32 1.0, %v687
    %v689 = vmul.f32 %v686, %v688
    %v690 = vadd.f32 %v686, %v689
    %vm691 = vweird.f32 %v685
    %vm692 = vweird.f32 %v686
    %vm693 = vmor %vm691, %vm692
    %v694 = vsel %vm693, %v686, %v690
    %v695 = vand.u32 2147483647, %v685
    %vm696 = vcmp.eq.f32.partialorder %v695, 8.507059e+37
    %v697 = vand.u32 %v685, 2147483648
    %v698 = vor.u32 1.1754944e-38, %v697
    %v699 = vsel %vm696, %v698, %v694
    %v700 = vmul.f32 %v675, %v699
    %v701 = vmin.f32 %v700, 1.0
    %v702 = vmax.f32 %v701, -1.0
    %v703 = vmul.f32 %v662, %v662
    %v704 = vmin.f32 16.0, %v703
    %v705 = vmul.f32 %v704, 2.1237322e-06
    %v706 = vadd.f32 %v705, 0.00028619796
    %v707 = vmul.f32 %v704, %v706
    %v708 = vadd.f32 %v707, 0.0036580483
    %v709 = vmul.f32 %v704, %v708
    %v710 = vadd.f32 %v709, 0.05243302
    %v711 = vmul.f32 %v704, %v710
    %v712 = vadd.f32 %v711, 0.18741608
    %v713 = vmul.f32 %v704, %v712
    %v714 = vadd.f32 %v713, 1.1283791
    %v715 = vmul.f32 %v662, %v714
    %v716 = vmul.f32 %v704, 3.8918573e-05
    %v717 = vadd.f32 %v716, 0.001143296
    %v718 = vmul.f32 %v704, %v717
    %v719 = vadd.f32 %v718, 0.014752088
    %v720 = vmul.f32 %v704, %v719
    %v721 = vadd.f32 %v720, 0.112945676
    %v722 = vmul.f32 %v704, %v721
    %v723 = vadd.f32 %v722, 0.4994258
    %v724 = vmul.f32 %v704, %v723
    %v725 = vadd.f32 %v724, 1.0
    %v726 = vrcp.pop %v725
    %v727 = vmul.f32 %v725, %v726
    %v728 = vsub.f32 1.0, %v727
    %v729 = vmul.f32 %v726, %v728
    %v730 = vadd.f32 %v726, %v729
    %vm731 = vweird.f32 %v725
    %vm732 = vweird.f32 %v726
    %vm733 = vmor %vm731, %vm732
    %v734 = vsel %vm733, %v726, %v730
    %v735 = vand.u32 2147483647, %v725
    %vm736 = vcmp.eq.f32.partialorder %v735, 8.507059e+37
    %v737 = vand.u32 %v725, 2147483648
    %v738 = vor.u32 1.1754944e-38, %v737
    %v739 = vsel %vm736, %v738, %v734
    %v740 = vmul.f32 %v715, %v739
    %v741 = vmin.f32 %v740, 1.0
    %v742 = vmax.f32 %v741, -1.0
    %v743 = vadd.f32 %v702, 1.0
    %v744 = vadd.f32 %v742, 1.0
    %v745 = vmul.f32 %v659, %v743
    %v746 = vmul.f32 %v660, %v744
    %v747 = vld [vmem:[#allocation12] sm:$0xff]
    %v748 = vld [vmem:[#allocation12 + $0x8] sm:$0xff]
    %v749 = vld [vmem:[#allocation12 + $0x10] sm:$0xff]
    %v750 = vld [vmem:[#allocation12 + $0x18] sm:$0xff]
    %v751 = vld [vmem:[#allocation12 + $0x20] sm:$0xff]
    %v752 = vld [vmem:[#allocation12 + $0x28] sm:$0xff]
    %v753 = vld [vmem:[#allocation12 + $0x30] sm:$0xff]
    %v754 = vld [vmem:[#allocation12 + $0x38] sm:$0xff]
    %v755 = vld [vmem:[#allocation12 + $0x40] sm:$0xff]
    %v756 = vld [vmem:[#allocation12 + $0x48] sm:$0xff]
    %v757 = vld [vmem:[#allocation12 + $0x50] sm:$0xff]
    %v758 = vld [vmem:[#allocation12 + $0x58] sm:$0xff]
    %v759 = vld [vmem:[#allocation12 + $0x60] sm:$0xff]
    %v760 = vld [vmem:[#allocation12 + $0x68] sm:$0xff]
    %v761 = vld [vmem:[#allocation12 + $0x70] sm:$0xff]
    %v762 = vld [vmem:[#allocation12 + $0x78] sm:$0xff]
    %v763 = vld [vmem:[#allocation14] sm:$0xff]
    %v764 = vld [vmem:[#allocation14 + $0x8] sm:$0xff]
    %v765 = vld [vmem:[#allocation14 + $0x10] sm:$0xff]
    %v766 = vld [vmem:[#allocation14 + $0x18] sm:$0xff]
    %v767 = vld [vmem:[#allocation14 + $0x20] sm:$0xff]
    %v768 = vld [vmem:[#allocation14 + $0x28] sm:$0xff]
    %v769 = vld [vmem:[#allocation14 + $0x30] sm:$0xff]
    %v770 = vld [vmem:[#allocation14 + $0x38] sm:$0xff]
    %v771 = vld [vmem:[#allocation14 + $0x40] sm:$0xff]
    %v772 = vld [vmem:[#allocation14 + $0x48] sm:$0xff]
    %v773 = vld [vmem:[#allocation14 + $0x50] sm:$0xff]
    %v774 = vld [vmem:[#allocation14 + $0x58] sm:$0xff]
    %v775 = vld [vmem:[#allocation14 + $0x60] sm:$0xff]
    %v776 = vld [vmem:[#allocation14 + $0x68] sm:$0xff]
    %v777 = vld [vmem:[#allocation14 + $0x70] sm:$0xff]
    %v778 = vld [vmem:[#allocation14 + $0x78] sm:$0xff]
    %779 = vmatpush.msra.mxu0 %v778
    %780 = vmatpush.msra.mxu0 %v777
    %781 = vmatpush.msra.mxu0 %v776
    %782 = vmatpush.msra.mxu0 %v775
    %783 = vmatpush.msra.mxu0 %v774
    %784 = vmatpush.msra.mxu0 %v773
    %785 = vmatpush.msra.mxu0 %v772
    %786 = vmatpush.msra.mxu0 %v771
    %787 = vmatpush.msra.mxu0 %v770
    %788 = vmatpush.msra.mxu0 %v769
    %789 = vmatpush.msra.mxu0 %v768
    %790 = vmatpush.msra.mxu0 %v767
    %791 = vmatpush.msra.mxu0 %v766
    %792 = vmatpush.msra.mxu0 %v765
    %793 = vmatpush.msra.mxu0 %v764
    %794 = vmatpush.msra.mxu0 %v763
    %795 = vmatmul.f32.gmra.mxu0 %v745
    %v796 = vpop.f32.mrf.mxu0
    %v797 = vadd.f32 0.0, %v796
    %798 = vmatmul.f32.gmra.mxu0 %v746
    %v799 = vpop.f32.mrf.mxu0
    %v800 = vadd.f32 0.0, %v799
    %801 = vdwg.mxu0
    %802 = vmatpush.msra.mxu0 %v762
    %803 = vmatpush.msra.mxu0 %v761
    %804 = vmatpush.msra.mxu0 %v760
    %805 = vmatpush.msra.mxu0 %v759
    %806 = vmatpush.msra.mxu0 %v758
    %807 = vmatpush.msra.mxu0 %v757
    %808 = vmatpush.msra.mxu0 %v756
    %809 = vmatpush.msra.mxu0 %v755
    %810 = vmatpush.msra.mxu0 %v754
    %811 = vmatpush.msra.mxu0 %v753
    %812 = vmatpush.msra.mxu0 %v752
    %813 = vmatpush.msra.mxu0 %v751
    %814 = vmatpush.msra.mxu0 %v750
    %815 = vmatpush.msra.mxu0 %v749
    %816 = vmatpush.msra.mxu0 %v748
    %817 = vmatpush.msra.mxu0 %v747
    %818 = vmatmul.f32.gmra.mxu0 %v426
    %v819 = vpop.f32.mrf.mxu0
    %v820 = vadd.f32 %v797, %v819
    %821 = vmatmul.f32.gmra.mxu0 %v427
    %v822 = vpop.f32.mrf.mxu0
    %v823 = vadd.f32 %v800, %v822
    %824 = vdwg.mxu0
    %v825 = vld [vmem:[%s13] sm:$0x1]
    %v827 = vperm.slane %v825, 0
    %v829 = vadd.f32 %v820, %v827
    %v830 = vadd.f32 %v823, %v827
    %v831 = vxor.u32 %v829, 2147483648
    %v832 = vxor.u32 %v830, 2147483648
    %v833 = vmul.f32 %v831, 1.442695
    %v834 = vpow.pop %v833
    %v835 = vmul.f32 %v832, 1.442695
    %v836 = vpow.pop %v835
    %v837 = vadd.f32 %v834, 1.0
    %v838 = vadd.f32 %v836, 1.0
    %v839 = vrcp.pop %v837
    %v840 = vmul.f32 %v837, %v839
    %v841 = vsub.f32 1.0, %v840
    %v842 = vmul.f32 %v839, %v841
    %v843 = vadd.f32 %v839, %v842
    %vm844 = vweird.f32 %v837
    %vm845 = vweird.f32 %v839
    %vm846 = vmor %vm844, %vm845
    %v847 = vsel %vm846, %v839, %v843
    %v848 = vand.u32 2147483647, %v837
    %vm849 = vcmp.eq.f32.partialorder %v848, 8.507059e+37
    %v850 = vand.u32 %v837, 2147483648
    %v851 = vor.u32 1.1754944e-38, %v850
    %v852 = vsel %vm849, %v851, %v847
    %v853 = vmul.f32 1.0, %v852
    %v854 = vrcp.pop %v838
    %v855 = vmul.f32 %v838, %v854
    %v856 = vsub.f32 1.0, %v855
    %v857 = vmul.f32 %v854, %v856
    %v858 = vadd.f32 %v854, %v857
    %vm859 = vweird.f32 %v838
    %vm860 = vweird.f32 %v854
    %vm861 = vmor %vm859, %vm860
    %v862 = vsel %vm861, %v854, %v858
    %v863 = vand.u32 2147483647, %v838
    %vm864 = vcmp.eq.f32.partialorder %v863, 8.507059e+37
    %v865 = vand.u32 %v838, 2147483648
    %v866 = vor.u32 1.1754944e-38, %v865
    %v867 = vsel %vm864, %v866, %v862
    %v868 = vmul.f32 1.0, %v867
    %s869 = sld [smem:[#allocation2]]
    %v870 = vsub.f32 %v745, %v426
    %v871 = vsub.f32 %v746, %v427
    %v872 = vstv %s869
    %v873 = vmul.f32 %v872, %v870
    %v874 = vmul.f32 %v872, %v871
    %v875 = vadd.f32 %v426, %v873
    %v876 = vadd.f32 %v427, %v874
    %v877 = vsub.f32 %v875, %v164
    %v878 = vsub.f32 %v876, %v165
    %v879 = vmul.f32 %v853, %v877
    %v880 = vmul.f32 %v868, %v878
    %v881 = vadd.f32 %v164, %v879
    %v882 = vadd.f32 %v165, %v880
    %883 = vst [vmem:[#allocation15] sm:$0xff] %v881
    %884 = vst [vmem:[#allocation15 + $0x8] sm:$0xff] %v882
    %885 = vst [vmem:[#allocation16] sm:$0xff] %v426
    %886 = vst [vmem:[#allocation16 + $0x8] sm:$0xff] %v427
    // Predicated region
    $region90: #{tpu_custom_call.1} parent=1 // pred_check
      _
    $region91: #{tpu_custom_call.1} parent=1 // pred_check_branch
      %888 = sbr.rel (0) target = $region93
    $region92: #{tpu_custom_call.1} parent=1 // pred_region
      %890 = vsyncadd [#allocation5], 0
      %s891 = sshll.u32 [#allocation15], 4
      %s892 = int_to_ptr.vmem [resolvable:$true] %s891
      %s893 = sshll.u32 %s15, 4
      %s894 = int_to_ptr.hbm [resolvable:$true] %s893
      %899 = dma.vmem_to_hbm [thread:$0]  %s892, 256, %s894, [#allocation5], 128, 128, 8
    $region93: #{tpu_custom_call.1} parent=1 // pred_fallthru
      _
    // Predicated region
    $region94: #{tpu_custom_call.1} parent=1 // pred_check
      _
    $region95: #{tpu_custom_call.1} parent=1 // pred_check_branch
      %901 = sbr.rel (0) target = $region97
    $region96: #{tpu_custom_call.1} parent=1 // pred_region
      %903 = vsyncadd [#allocation17], 0
      %s904 = sshll.u32 [#allocation16], 4
      %s905 = int_to_ptr.vmem [resolvable:$true] %s904
      %s906 = sshll.u32 %s16, 4
      %s907 = int_to_ptr.hbm [resolvable:$true] %s906
      %912 = dma.vmem_to_hbm [thread:$0]  %s905, 256, %s907, [#allocation17], 128, 128, 8
    $region97: #{tpu_custom_call.1} parent=1 // pred_fallthru
      _
    // Predicated region
    $region98: #{tpu_custom_call.1} parent=1 // pred_check
      _
    $region99: #{tpu_custom_call.1} parent=1 // pred_check_branch
      %914 = sbr.rel (0) target = $region101
    $region100: #{tpu_custom_call.1} parent=1 // pred_region
      %916 = dma.done [#allocation5], 256
    $region101: #{tpu_custom_call.1} parent=1 // pred_fallthru
      _
    // Predicated region
    $region102: #{tpu_custom_call.1} parent=1 // pred_check
      _
    $region103: #{tpu_custom_call.1} parent=1 // pred_check_branch
      %918 = sbr.rel (0) target = $region105
    $region104: #{tpu_custom_call.1} parent=1 // pred_region
      %920 = dma.done [#allocation17], 256
    $region105: #{tpu_custom_call.1} parent=1 // pred_fallthru
      _
    %921 = vsyncpa [#allocation4], 1
    %922 = vsyncpa [#allocation7], 1
    %923 = vsyncpa [#allocation10], 1
    %924 = vsyncpa [#allocation13], 1
    %925 = vsyncpa [#allocation5], 1
    %926 = vsyncpa [#allocation17], 1

</llo_original>
